<compile_context>
chip_gen: v5e
topology: v5e:2x2
jax: 0.10.0
libtpu: 0.0.40
codegen_flags: <defaults>
</compile_context>

<pallas_src>
import jax
import jax.numpy as jnp
from jax.experimental import pallas as pl
from jax.experimental.pallas import tpu as pltpu


def _conv_relu_kernel(x_ref, w_ref, b_ref, o_ref):
    # x_ref: (1, H+2, W+2, Cin)  whole padded image of batch element n (resident)
    # w_ref: (9*Cin, Coutp)      im2col weights, rows ordered ((kh*3+kw)*Cin + cin)
    # b_ref: (1, Coutp)          bias (zero-padded to Coutp)
    # o_ref: (1, TH, W, Coutp)   output strip for h-tile `t`
    TH, W, Coutp = o_ref.shape[1], o_ref.shape[2], o_ref.shape[3]
    Cin = x_ref.shape[3]

    t = pl.program_id(1)
    row0 = pl.multiple_of(t * TH, TH)
    # Halo window for this strip: TH + 2 padded rows.
    window = x_ref[0, pl.ds(row0, TH + 2), :, :]            # (TH+2, W+2, Cin)

    # im2col: 9 shifted (TH*W, Cin) views concatenated along K -> one matmul.
    cols = []
    for kh in range(3):
        for kw in range(3):
            cols.append(window[kh:kh + TH, kw:kw + W, :].reshape(TH * W, Cin))
    patch = jnp.concatenate(cols, axis=-1)                  # (TH*W, 9*Cin)

    acc = jnp.dot(patch, w_ref[...], preferred_element_type=jnp.float32)
    acc = acc + b_ref[...]                                  # bias epilogue
    acc = jnp.maximum(acc, 0.0)                             # ReLU
    o_ref[...] = acc.reshape(1, TH, W, Coutp).astype(o_ref.dtype)


def _choose_tile_h(H, W):
    """Largest divisor TH of H with TH*W <= 128: ~one MXU pass of rows per tile
    and a grid with >2 steps (megacore).  Falls back to TH=1 for very wide W."""
    best = None
    for th in range(1, H + 1):
        if H % th == 0 and th * W <= 128:
            best = th
    return best if best is not None else 1


def conv_relu_pallas(x_nchw, w_oihw, b):
    """Conv2d(k=3, s=1, p=1) + ReLU.  x: [N, Cin, H, W] -> [N, Cout, H, W]."""
    N, Cin, H, W = x_nchw.shape
    Cout = w_oihw.shape[0]
    Coutp = ((Cout + 127) // 128) * 128          # lane-dense output channels
    TH = _choose_tile_h(H, W)
    n_th = H // TH

    # NCHW -> NHWC + 1-pixel spatial halo pad (kept in the wrapper; folding the
    # layout change / pad into the kernel via halo DMA is a further optimization).
    x_nhwc = jnp.transpose(x_nchw, (0, 2, 3, 1))
    x_pad = jnp.pad(x_nhwc, ((0, 0), (1, 1), (1, 1), (0, 0)))

    # OIHW -> im2col matrix (9*Cin, Coutp); row index = (kh*3 + kw)*Cin + cin.
    w_hwio = jnp.transpose(w_oihw, (2, 3, 1, 0)).reshape(9 * Cin, Cout)
    w2d = jnp.pad(w_hwio, ((0, 0), (0, Coutp - Cout)))
    b2d = jnp.pad(b.reshape(1, Cout), ((0, 0), (0, Coutp - Cout)))

    out_nhwc = pl.pallas_call(
        _conv_relu_kernel,
        out_shape=jax.ShapeDtypeStruct((N, H, W, Coutp), x_nchw.dtype),
        grid_spec=pltpu.PrefetchScalarGridSpec(
            num_scalar_prefetch=0,
            grid=(N, n_th),
            in_specs=[
                # Block index depends only on n: the padded image is DMA'd once
                # per batch element and stays in VMEM across its H-tiles.
                pl.BlockSpec((1, H + 2, W + 2, Cin), lambda n, t: (n, 0, 0, 0)),
                pl.BlockSpec((9 * Cin, Coutp), lambda n, t: (0, 0)),
                pl.BlockSpec((1, Coutp), lambda n, t: (0, 0)),
            ],
            out_specs=pl.BlockSpec((1, TH, W, Coutp),
                                   lambda n, t: (n, t, 0, 0)),
        ),
        compiler_params=pltpu.CompilerParams(
            dimension_semantics=("parallel", "parallel")),
    )(x_pad, w2d, b2d)

    # Drop zero-padded channels, back to PyTorch's NCHW convention.
    return jnp.transpose(out_nhwc[..., :Cout], (0, 3, 1, 2))


def conv_relu_reference(x_nchw, w_oihw, b):
    out = jax.lax.conv_general_dilated(
        x_nchw, w_oihw, window_strides=(1, 1), padding=((1, 1), (1, 1)),
        dimension_numbers=("NCHW", "OIHW", "NCHW"))
    out = out + b.reshape(1, -1, 1, 1)
    return jnp.maximum(out, 0.0)


if __name__ == "__main__":
    key = jax.random.PRNGKey(0)
    k_x, k_w, k_b = jax.random.split(key, 3)

    N, Cin, H, W = 2, 4, 16, 16
    Cout = 8

    x = jax.random.normal(k_x, (N, Cin, H, W), dtype=jnp.float32)
    # Deterministic PyTorch-style uniform init with bound 1/sqrt(fan_in).
    fan_in = Cin * 3 * 3
    bound = 1.0 / (fan_in ** 0.5)
    w = jax.random.uniform(k_w, (Cout, Cin, 3, 3), jnp.float32, -bound, bound)
    b = jax.random.uniform(k_b, (Cout,), jnp.float32, -bound, bound)

    out = jax.block_until_ready(conv_relu_pallas(x, w, b))

    ref = conv_relu_reference(x, w, b)
    assert out.shape == (N, Cout, H, W)
    assert jnp.allclose(out, ref, atol=1e-5, rtol=1e-5), "mismatch vs reference"

    print("KERNEL_OK")
</pallas_src>

<mosaic_0001>
module attributes {stable_mosaic.version = 11 : i64} {
  func.func @_conv_relu_kernel(%arg0: i32, %arg1: i32, %arg2: memref<1x18x18x4xf32, #tpu.memory_space<vmem>>, %arg3: memref<36x128xf32, #tpu.memory_space<vmem>>, %arg4: memref<1x128xf32, #tpu.memory_space<vmem>>, %arg5: memref<1x8x16x128xf32, #tpu.memory_space<vmem>>) attributes {dimension_semantics = [#tpu.dimension_semantics<parallel>, #tpu.dimension_semantics<parallel>], iteration_bounds = array<i64: 2, 2>, scalar_prefetch = 0 : i64, scratch_operands = 0 : i64, tpu.core_type = #tpu.core_type<tc>, window_params = [{transform_indices = @transform_0, window_bounds = array<i64: 1, 18, 18, 4>}, {pipeline_mode = #tpu.pipeline_mode<synchronous>, transform_indices = @transform_1, window_bounds = array<i64: 36, 128>}, {pipeline_mode = #tpu.pipeline_mode<synchronous>, transform_indices = @transform_2, window_bounds = array<i64: 1, 128>}, {transform_indices = @transform_3, window_bounds = array<i64: 1, 8, 16, 128>}]} {
    %c8_i32 = arith.constant 8 : i32
    %0 = arith.muli %arg1, %c8_i32 : i32
    %1 = tpu.assume_multiple %0, 8 : i32
    %c0 = arith.constant 0 : index
    %2 = arith.index_cast %1 : i32 to index
    %c0_0 = arith.constant 0 : index
    %c0_1 = arith.constant 0 : index
    %3 = vector.load %arg2[%c0, %2, %c0_0, %c0_1] : memref<1x18x18x4xf32, #tpu.memory_space<vmem>>, vector<1x10x18x4xf32>
    %4 = vector.shape_cast %3 : vector<1x10x18x4xf32> to vector<10x18x4xf32>
    %5 = vector.extract_strided_slice %4 {offsets = [0, 0, 0], sizes = [8, 16, 4], strides = [1, 1, 1]} : vector<10x18x4xf32> to vector<8x16x4xf32>
    %6 = vector.shape_cast %5 : vector<8x16x4xf32> to vector<128x4xf32>
    %7 = vector.extract_strided_slice %4 {offsets = [0, 1, 0], sizes = [8, 16, 4], strides = [1, 1, 1]} : vector<10x18x4xf32> to vector<8x16x4xf32>
    %8 = vector.shape_cast %7 : vector<8x16x4xf32> to vector<128x4xf32>
    %9 = vector.extract_strided_slice %4 {offsets = [0, 2, 0], sizes = [8, 16, 4], strides = [1, 1, 1]} : vector<10x18x4xf32> to vector<8x16x4xf32>
    %10 = vector.shape_cast %9 : vector<8x16x4xf32> to vector<128x4xf32>
    %11 = vector.extract_strided_slice %4 {offsets = [1, 0, 0], sizes = [8, 16, 4], strides = [1, 1, 1]} : vector<10x18x4xf32> to vector<8x16x4xf32>
    %12 = vector.shape_cast %11 : vector<8x16x4xf32> to vector<128x4xf32>
    %13 = vector.extract_strided_slice %4 {offsets = [1, 1, 0], sizes = [8, 16, 4], strides = [1, 1, 1]} : vector<10x18x4xf32> to vector<8x16x4xf32>
    %14 = vector.shape_cast %13 : vector<8x16x4xf32> to vector<128x4xf32>
    %15 = vector.extract_strided_slice %4 {offsets = [1, 2, 0], sizes = [8, 16, 4], strides = [1, 1, 1]} : vector<10x18x4xf32> to vector<8x16x4xf32>
    %16 = vector.shape_cast %15 : vector<8x16x4xf32> to vector<128x4xf32>
    %17 = vector.extract_strided_slice %4 {offsets = [2, 0, 0], sizes = [8, 16, 4], strides = [1, 1, 1]} : vector<10x18x4xf32> to vector<8x16x4xf32>
    %18 = vector.shape_cast %17 : vector<8x16x4xf32> to vector<128x4xf32>
    %19 = vector.extract_strided_slice %4 {offsets = [2, 1, 0], sizes = [8, 16, 4], strides = [1, 1, 1]} : vector<10x18x4xf32> to vector<8x16x4xf32>
    %20 = vector.shape_cast %19 : vector<8x16x4xf32> to vector<128x4xf32>
    %21 = vector.extract_strided_slice %4 {offsets = [2, 2, 0], sizes = [8, 16, 4], strides = [1, 1, 1]} : vector<10x18x4xf32> to vector<8x16x4xf32>
    %22 = vector.shape_cast %21 : vector<8x16x4xf32> to vector<128x4xf32>
    %23 = tpu.concatenate %6, %8, %10, %12, %14, %16, %18, %20, %22 in 1 : vector<128x4xf32>, vector<128x4xf32>, vector<128x4xf32>, vector<128x4xf32>, vector<128x4xf32>, vector<128x4xf32>, vector<128x4xf32>, vector<128x4xf32>, vector<128x4xf32> -> vector<128x36xf32>
    %c0_2 = arith.constant 0 : index
    %c0_3 = arith.constant 0 : index
    %24 = vector.load %arg3[%c0_2, %c0_3] : memref<36x128xf32, #tpu.memory_space<vmem>>, vector<36x128xf32>
    %cst = arith.constant dense<0.000000e+00> : vector<128x128xf32>
    %25 = tpu.matmul %23, %24, %cst {dimension_numbers = #tpu.dot_dimension_numbers<[1], [0], [0], [1], [0, 0, 1, 1], [], []>} : vector<128x36xf32>, vector<36x128xf32>, vector<128x128xf32> -> vector<128x128xf32>
    %c0_4 = arith.constant 0 : index
    %c0_5 = arith.constant 0 : index
    %26 = vector.load %arg4[%c0_4, %c0_5] : memref<1x128xf32, #tpu.memory_space<vmem>>, vector<1x128xf32>
    %27 = vector.broadcast %26 : vector<1x128xf32> to vector<128x128xf32>
    %28 = arith.addf %25, %27 : vector<128x128xf32>
    %cst_6 = arith.constant 0.000000e+00 : f32
    %29 = vector.broadcast %cst_6 : f32 to vector<128x128xf32>
    %30 = arith.maximumf %28, %29 : vector<128x128xf32>
    %31 = vector.shape_cast %30 : vector<128x128xf32> to vector<1x8x16x128xf32>
    %c0_7 = arith.constant 0 : index
    %c0_8 = arith.constant 0 : index
    %c0_9 = arith.constant 0 : index
    %c0_10 = arith.constant 0 : index
    %32 = vector.load %arg5[%c0_7, %c0_8, %c0_9, %c0_10] : memref<1x8x16x128xf32, #tpu.memory_space<vmem>>, vector<1x8x16x128xf32>
    tpu.vector_store %arg5[%c0_7, %c0_8, %c0_9, %c0_10], %31 {strides = array<i32>} : memref<1x8x16x128xf32, #tpu.memory_space<vmem>>, vector<1x8x16x128xf32>,
    return
  }
  func.func @transform_0(%arg0: i32, %arg1: i32) -> (i32, i32, i32, i32) {
    %c0_i32 = arith.constant 0 : i32
    %c0_i32_0 = arith.constant 0 : i32
    %c0_i32_1 = arith.constant 0 : i32
    %c0_i32_2 = arith.constant 0 : i32
    return %arg0, %c0_i32, %c0_i32_0, %c0_i32_1 : i32, i32, i32, i32
  }
  func.func @transform_1(%arg0: i32, %arg1: i32) -> (i32, i32) {
    %c0_i32 = arith.constant 0 : i32
    %c0_i32_0 = arith.constant 0 : i32
    %c0_i32_1 = arith.constant 0 : i32
    return %c0_i32, %c0_i32_0 : i32, i32
  }
  func.func @transform_2(%arg0: i32, %arg1: i32) -> (i32, i32) {
    %c0_i32 = arith.constant 0 : i32
    %c0_i32_0 = arith.constant 0 : i32
    %c0_i32_1 = arith.constant 0 : i32
    return %c0_i32, %c0_i32_0 : i32, i32
  }
  func.func @transform_3(%arg0: i32, %arg1: i32) -> (i32, i32, i32, i32) {
    %c0_i32 = arith.constant 0 : i32
    %c0_i32_0 = arith.constant 0 : i32
    %c0_i32_1 = arith.constant 0 : i32
    return %arg0, %arg1, %c0_i32, %c0_i32_0 : i32, i32, i32, i32
  }
}

</mosaic_0001>

<llo_original>
// kernel: tpu_custom_call.1
$region0: #{tpu_custom_call.1}
  #allocation0 [shape = 'u32[]', space=smem, size = 0x4, offset = 0x4, fixed_abs, tag = 'smem constant byte address 0x4 - core index']
  #allocation1 [shape = 'u32[72,128]{1,0:T(1,128)}', space=vmem, size = 0x9000, scoped, tag = 'internal scratch']
  %s0 = inlined_call_operand.vmem [shape: f32[2,18,18,4], index: 0, kind: input, shape index: {}]
  %s1 = inlined_call_operand.vmem [shape: f32[36,128], index: 1, kind: input, shape index: {}]
  %s2 = inlined_call_operand.vmem [shape: f32[1,128], index: 2, kind: input, shape index: {}]
  %s3 = inlined_call_operand.hbm [shape: f32[2,16,16,128], index: 3, kind: output, shape index: {}]
  %s4 = sld [smem:[#allocation0]]
  $region45: #{tpu_custom_call.1} parent=0
    _
  %s6 = ssub.s32 1, %s4
  %s7 = scalar_select 0, %s6, %s4
  $region1: #{tpu_custom_call.1} parent=0
    #allocation2 [shape = 'u8[131072]{0}', space=vmem, size = 0x20000, scoped, tag = 'output window, operand 0']
    #allocation3 [shape = 's32[2]{0}', space=sflag, size = 0x8, scoped, tag = 'scoped memory for tpu_custom_call.1']
    %8 = vsyncpa [#allocation3], 0
    %s9 = scalar_lea.sflag [#allocation3], 1
    %10 = vsyncpa %s9, 0
    loop: start=0, step=1, limit=6
    $region2: #{tpu_custom_call.1} parent=1 // loop_pre_header
      _
    $region3: #{tpu_custom_call.1} parent=1 // loop_header
      %s12 = sphi 0, %s16
      %p13 = scmp.ge.s32.totalorder %s12, 6
      %s19 = sphi 0, %s31
      %s20 = sphi 0, %s27
      %s21 = sphi 0, %s19
      %s22 = sphi 0, %s20
      %s23 = sphi 0, %s21
      %s24 = sphi 0, %s22
      %s34 = sphi 0, %s36
      %s37 = sphi 0, %s34
      %s38 = sphi 0, %s37
      %s54 = sphi 0, %s38
      %s58 = sphi 0, %s58
      %s60 = sphi 0, %s58
      %s61 = sphi 0, %s60
      %s75 = sphi 0, %s61
      %s79 = sphi 0, %s79
      %s81 = sphi 0, %s79
      %s82 = sphi 0, %s81
      %s96 = sphi 0, %s82
      %s104 = sphi 0, %s106
      %s107 = sphi 0, %s104
      %s108 = sphi 0, %s107
      %s124 = sphi 0, %s108
    $region4: #{tpu_custom_call.1} parent=1 // loop_header_branch
      %15 = sbr.rel (%p13) target = $region8
    $region5: #{tpu_custom_call.1} parent=1 // loop_body
      %s17 = ssub.s32 %s12, 1
      %s18 = ssub.s32 %s12, 2
      %s25 = sadd.s32 1, %s20
      %p26 = scmp.ge.s32.totalorder %s25, 2
      %s27 = scalar_select %p26, 0, %s25
      %s28 = sadd.s32 1, %s19
      %s29 = scalar_select %p26, %s28, %s19
      %p30 = scmp.ge.s32.totalorder %s29, 2
      %s31 = scalar_select %p30, 0, %s29
      %s32 = ssub.s32 %s19, %s31
      %p33 = scmp.eq.s32.totalorder %s32, 0
      %s35 = sadd.s32 %s34, 1
      %s36 = scalar_select %p33, %s34, %s35
      %p39 = pneg %p33
      %p40 = scmp.eq.s32.totalorder %s12, 3
      %p41 = por %p39, %p40
      %p42 = scmp.ne.s32.totalorder %s34, %s37
      %p43 = scmp.eq.s32.totalorder %s12, 0
      %p44 = por %p42, %p43
      %p45 = scmp.ne.s32.totalorder %s34, %s37
      %p46 = scmp.eq.s32.totalorder %s17, 3
      %p47 = por %p45, %p46
      %p48 = scmp.ne.s32.totalorder %s37, %s38
      %p49 = scmp.eq.s32.totalorder %s17, 0
      %p50 = por %p48, %p49
      %p51 = scmp.ne.s32.totalorder %s37, %s38
      %p52 = scmp.eq.s32.totalorder %s18, 3
      %p53 = por %p51, %p52
      %p55 = scmp.ne.s32.totalorder %s38, %s54
      %p56 = scmp.eq.s32.totalorder %s18, 0
      %p57 = por %p55, %p56
      %s59 = sadd.s32 %s58, 1
      %p62 = scmp.eq.s32.totalorder %s12, 3
      %p63 = scmp.ne.s32.totalorder %s58, %s60
      %p64 = scmp.eq.s32.totalorder %s12, 0
      %p65 = por %p63, %p64
      %p66 = scmp.ne.s32.totalorder %s58, %s60
      %p67 = scmp.eq.s32.totalorder %s17, 3
      %p68 = por %p66, %p67
      %p69 = scmp.ne.s32.totalorder %s60, %s61
      %p70 = scmp.eq.s32.totalorder %s17, 0
      %p71 = por %p69, %p70
      %p72 = scmp.ne.s32.totalorder %s60, %s61
      %p73 = scmp.eq.s32.totalorder %s18, 3
      %p74 = por %p72, %p73
      %p76 = scmp.ne.s32.totalorder %s61, %s75
      %p77 = scmp.eq.s32.totalorder %s18, 0
      %p78 = por %p76, %p77
      %s80 = sadd.s32 %s79, 1
      %p83 = scmp.eq.s32.totalorder %s12, 3
      %p84 = scmp.ne.s32.totalorder %s79, %s81
      %p85 = scmp.eq.s32.totalorder %s12, 0
      %p86 = por %p84, %p85
      %p87 = scmp.ne.s32.totalorder %s79, %s81
      %p88 = scmp.eq.s32.totalorder %s17, 3
      %p89 = por %p87, %p88
      %p90 = scmp.ne.s32.totalorder %s81, %s82
      %p91 = scmp.eq.s32.totalorder %s17, 0
      %p92 = por %p90, %p91
      %p93 = scmp.ne.s32.totalorder %s81, %s82
      %p94 = scmp.eq.s32.totalorder %s18, 3
      %p95 = por %p93, %p94
      %p97 = scmp.ne.s32.totalorder %s82, %s96
      %p98 = scmp.eq.s32.totalorder %s18, 0
      %p99 = por %p97, %p98
      %s100 = ssub.s32 %s19, %s31
      %s101 = ssub.s32 %s20, %s27
      %s102 = sor.u32 %s100, %s101
      %p103 = scmp.eq.s32.totalorder %s102, 0
      %s105 = sadd.s32 %s104, 1
      %s106 = scalar_select %p103, %s104, %s105
      %p109 = pneg %p103
      %p110 = scmp.eq.s32.totalorder %s12, 3
      %p111 = por %p109, %p110
      %p112 = scmp.ne.s32.totalorder %s104, %s107
      %p113 = scmp.eq.s32.totalorder %s12, 0
      %p114 = por %p112, %p113
      %p115 = scmp.ne.s32.totalorder %s104, %s107
      %p116 = scmp.eq.s32.totalorder %s17, 3
      %p117 = por %p115, %p116
      %p118 = scmp.ne.s32.totalorder %s107, %s108
      %p119 = scmp.eq.s32.totalorder %s17, 0
      %p120 = por %p118, %p119
      %p121 = scmp.ne.s32.totalorder %s107, %s108
      %p122 = scmp.eq.s32.totalorder %s18, 3
      %p123 = por %p121, %p122
      %p125 = scmp.ne.s32.totalorder %s108, %s124
      %p126 = scmp.eq.s32.totalorder %s18, 0
      %p127 = por %p125, %p126
      %p128 = scmp.le.s32.totalorder 1, %s12
      %p129 = scmp.lt.s32.totalorder %s12, 5
      %p130 = pnand %p128, %p129
      %p131 = pneg %p130
      // Predicated region
      $region9: #{tpu_custom_call.1} parent=5 // pred_check
        _
      $region10: #{tpu_custom_call.1} parent=5 // pred_check_branch
        %133 = sbr.rel (%p130) target = $region12
      $region11: #{tpu_custom_call.1} parent=5 // pred_region
        %s134 = ssub.s32 %s12, 1
        // Predicated region
        $region13: #{tpu_custom_call.1} parent=11 // pred_check
          %p135 = pneg %p71
        $region14: #{tpu_custom_call.1} parent=11 // pred_check_branch
          %137 = sbr.rel (%p135) target = $region16
        $region15: #{tpu_custom_call.1} parent=11 // pred_region
          _
        $region16: #{tpu_custom_call.1} parent=11 // pred_fallthru
          _
        // Predicated region
        $region17: #{tpu_custom_call.1} parent=11 // pred_check
          %p138 = pneg %p92
        $region18: #{tpu_custom_call.1} parent=11 // pred_check_branch
          %140 = sbr.rel (%p138) target = $region20
        $region19: #{tpu_custom_call.1} parent=11 // pred_region
          _
        $region20: #{tpu_custom_call.1} parent=11 // pred_fallthru
          _
      $region12: #{tpu_custom_call.1} parent=5 // pred_fallthru
        _
      %p141 = scmp.lt.s32.totalorder %s12, 4
      // Predicated region
      $region21: #{tpu_custom_call.1} parent=5 // pred_check
        %p142 = pneg %p141
      $region22: #{tpu_custom_call.1} parent=5 // pred_check_branch
        %144 = sbr.rel (%p142) target = $region24
      $region23: #{tpu_custom_call.1} parent=5 // pred_region
        // Predicated region
        $region25: #{tpu_custom_call.1} parent=23 // pred_check
          %p145 = pneg %p44
        $region26: #{tpu_custom_call.1} parent=23 // pred_check_branch
          %147 = sbr.rel (%p145) target = $region28
        $region27: #{tpu_custom_call.1} parent=23 // pred_region
          %p148 = scmp.lt.s32.totalorder %s19, 1
          %s149 = scalar_select %p148, %s19, 1
          %s150 = smul.addr %s149, 54
          %s151 = smul.addr %s150, 8
          %s152 = scalar_lea.vmem %s0, %s151
        $region28: #{tpu_custom_call.1} parent=23 // pred_fallthru
          _
      $region24: #{tpu_custom_call.1} parent=5 // pred_fallthru
        _
      %p153 = scmp.le.s32.totalorder 1, %s12
      %p154 = scmp.lt.s32.totalorder %s12, 5
      %p155 = pnand %p153, %p154
      %p156 = pneg %p155
      // Predicated region
      $region29: #{tpu_custom_call.1} parent=5 // pred_check
        _
      $region30: #{tpu_custom_call.1} parent=5 // pred_check_branch
        %158 = sbr.rel (%p155) target = $region32
      $region31: #{tpu_custom_call.1} parent=5 // pred_region
        %s159 = ssub.s32 %s12, 1
        %p160 = scmp.lt.s32.totalorder %s21, 1
        %s161 = scalar_select %p160, %s21, 1
        %s162 = smul.addr %s161, 54
        %s163 = smul.addr %s162, 8
        %s164 = scalar_lea.vmem %s0, %s163
        %p165 = pneg %p50
        %p166 = pneg %p47
        %p167 = pneg %p71
        %p168 = pneg %p68
        %p169 = pneg %p92
        %p170 = pneg %p89
        %p171 = pneg %p120
        %p172 = pneg %p117
        %s173 = sand.u32 %s107, 1
        %s174 = scalar_lea.sflag [#allocation3], %s173
        %s175 = sand.u32 %s107, 1
        %s176 = smul.addr %s175, 128
        %s177 = scalar_lea.vmem [#allocation2], %s176
        %p178 = scmp.lt.s32.totalorder %s21, 1
        %s179 = scalar_select %p178, %s21, 1
        %s180 = smul.addr %s179, 54
        %s181 = smul.addr %s180, 8
        %s182 = scalar_lea.vmem %s0, %s181
        %s183 = smul.u32 8, %s22
        %s184 = smul.u32 %s22, 8
        %s185 = smul.u32 %s184, 24
        %s186 = scalar_lea.vmem %s182, %s185
        %v187 = vld [vmem:[%s186] sm:$0xff]
        %v188 = vld [vmem:[%s186 + $0x8] sm:$0xff]
        %v189 = vld [vmem:[%s186 + $0x10] sm:$0x3]
        %v190 = vld [vmem:[%s186 + $0x18] sm:$0xff]
        %v191 = vld [vmem:[%s186 + $0x20] sm:$0xff]
        %v192 = vld [vmem:[%s186 + $0x28] sm:$0x3]
        %v193 = vld [vmem:[%s186 + $0x30] sm:$0xff]
        %v194 = vld [vmem:[%s186 + $0x38] sm:$0xff]
        %v195 = vld [vmem:[%s186 + $0x40] sm:$0x3]
        %v196 = vld [vmem:[%s186 + $0x48] sm:$0xff]
        %v197 = vld [vmem:[%s186 + $0x50] sm:$0xff]
        %v198 = vld [vmem:[%s186 + $0x58] sm:$0x3]
        %v199 = vld [vmem:[%s186 + $0x60] sm:$0xff]
        %v200 = vld [vmem:[%s186 + $0x68] sm:$0xff]
        %v201 = vld [vmem:[%s186 + $0x70] sm:$0x3]
        %v202 = vld [vmem:[%s186 + $0x78] sm:$0xff]
        %v203 = vld [vmem:[%s186 + $0x80] sm:$0xff]
        %v204 = vld [vmem:[%s186 + $0x88] sm:$0x3]
        %v205 = vld [vmem:[%s186 + $0x90] sm:$0xff]
        %v206 = vld [vmem:[%s186 + $0x98] sm:$0xff]
        %v207 = vld [vmem:[%s186 + $0xa0] sm:$0x3]
        %v208 = vld [vmem:[%s186 + $0xa8] sm:$0xff]
        %v209 = vld [vmem:[%s186 + $0xb0] sm:$0xff]
        %v210 = vld [vmem:[%s186 + $0xb8] sm:$0x3]
        %v211 = vld [vmem:[%s186 + $0xc0] sm:$0xff]
        %v212 = vld [vmem:[%s186 + $0xc8] sm:$0xff]
        %v213 = vld [vmem:[%s186 + $0xd0] sm:$0x3]
        %v214 = vld [vmem:[%s186 + $0xd8] sm:$0xff]
        %v215 = vld [vmem:[%s186 + $0xe0] sm:$0xff]
        %v216 = vld [vmem:[%s186 + $0xe8] sm:$0x3]
        %vm241 = vcmask 1046528
        %v242 = vrot.slane %v187, 1
        %v243 = vrot.slane %v188, 1
        %v244 = vsel %vm241, %v242, %v243
        %v245 = vrot.slane %v189, 1
        %v246 = vsel %vm241, %v243, %v245
        %v247 = vrot.slane %v190, 1
        %v248 = vrot.slane %v191, 1
        %v249 = vsel %vm241, %v247, %v248
        %v250 = vrot.slane %v192, 1
        %v251 = vsel %vm241, %v248, %v250
        %v252 = vrot.slane %v193, 1
        %v253 = vrot.slane %v194, 1
        %v254 = vsel %vm241, %v252, %v253
        %v255 = vrot.slane %v195, 1
        %v256 = vsel %vm241, %v253, %v255
        %v257 = vrot.slane %v196, 1
        %v258 = vrot.slane %v197, 1
        %v259 = vsel %vm241, %v257, %v258
        %v260 = vrot.slane %v198, 1
        %v261 = vsel %vm241, %v258, %v260
        %v262 = vrot.slane %v199, 1
        %v263 = vrot.slane %v200, 1
        %v264 = vsel %vm241, %v262, %v263
        %v265 = vrot.slane %v201, 1
        %v266 = vsel %vm241, %v263, %v265
        %v267 = vrot.slane %v202, 1
        %v268 = vrot.slane %v203, 1
        %v269 = vsel %vm241, %v267, %v268
        %v270 = vrot.slane %v204, 1
        %v271 = vsel %vm241, %v268, %v270
        %v272 = vrot.slane %v205, 1
        %v273 = vrot.slane %v206, 1
        %v274 = vsel %vm241, %v272, %v273
        %v275 = vrot.slane %v207, 1
        %v276 = vsel %vm241, %v273, %v275
        %v277 = vrot.slane %v208, 1
        %v278 = vrot.slane %v209, 1
        %v279 = vsel %vm241, %v277, %v278
        %v280 = vrot.slane %v210, 1
        %v281 = vsel %vm241, %v278, %v280
        %vm282 = vcmask 1045504
        %v283 = vrot.slane %v187, 2
        %v284 = vrot.slane %v188, 2
        %v285 = vsel %vm282, %v283, %v284
        %v286 = vrot.slane %v189, 2
        %v287 = vsel %vm282, %v284, %v286
        %v288 = vrot.slane %v190, 2
        %v289 = vrot.slane %v191, 2
        %v290 = vsel %vm282, %v288, %v289
        %v291 = vrot.slane %v192, 2
        %v292 = vsel %vm282, %v289, %v291
        %v293 = vrot.slane %v193, 2
        %v294 = vrot.slane %v194, 2
        %v295 = vsel %vm282, %v293, %v294
        %v296 = vrot.slane %v195, 2
        %v297 = vsel %vm282, %v294, %v296
        %v298 = vrot.slane %v196, 2
        %v299 = vrot.slane %v197, 2
        %v300 = vsel %vm282, %v298, %v299
        %v301 = vrot.slane %v198, 2
        %v302 = vsel %vm282, %v299, %v301
        %v303 = vrot.slane %v199, 2
        %v304 = vrot.slane %v200, 2
        %v305 = vsel %vm282, %v303, %v304
        %v306 = vrot.slane %v201, 2
        %v307 = vsel %vm282, %v304, %v306
        %v308 = vrot.slane %v202, 2
        %v309 = vrot.slane %v203, 2
        %v310 = vsel %vm282, %v308, %v309
        %v311 = vrot.slane %v204, 2
        %v312 = vsel %vm282, %v309, %v311
        %v313 = vrot.slane %v205, 2
        %v314 = vrot.slane %v206, 2
        %v315 = vsel %vm282, %v313, %v314
        %v316 = vrot.slane %v207, 2
        %v317 = vsel %vm282, %v314, %v316
        %v318 = vrot.slane %v208, 2
        %v319 = vrot.slane %v209, 2
        %v320 = vsel %vm282, %v318, %v319
        %v321 = vrot.slane %v210, 2
        %v322 = vsel %vm282, %v319, %v321
        %v326 = vrot.slane %v211, 1
        %v327 = vrot.slane %v212, 1
        %v328 = vsel %vm241, %v326, %v327
        %v329 = vrot.slane %v213, 1
        %v330 = vsel %vm241, %v327, %v329
        %v331 = vrot.slane %v211, 2
        %v332 = vrot.slane %v212, 2
        %v333 = vsel %vm282, %v331, %v332
        %v334 = vrot.slane %v213, 2
        %v335 = vsel %vm282, %v332, %v334
        %v339 = vrot.slane %v214, 1
        %v340 = vrot.slane %v215, 1
        %v341 = vsel %vm241, %v339, %v340
        %v342 = vrot.slane %v216, 1
        %v343 = vsel %vm241, %v340, %v342
        %v344 = vrot.slane %v214, 2
        %v345 = vrot.slane %v215, 2
        %v346 = vsel %vm282, %v344, %v345
        %v347 = vrot.slane %v216, 2
        %v348 = vsel %vm282, %v345, %v347
        %349 = vrot.lane.b32.xlu0 %v244, 4
        %v350 = vpop.permute.xlu0 %349
        %351 = vrot.lane.b32.xlu0 %v246, 4
        %v352 = vpop.permute.xlu0 %351
        %353 = vrot.lane.b32.xlu0 %v249, 4
        %v354 = vpop.permute.xlu0 %353
        %355 = vrot.lane.b32.xlu0 %v251, 4
        %v356 = vpop.permute.xlu0 %355
        %357 = vrot.lane.b32.xlu0 %v254, 4
        %v358 = vpop.permute.xlu0 %357
        %359 = vrot.lane.b32.xlu0 %v256, 4
        %v360 = vpop.permute.xlu0 %359
        %361 = vrot.lane.b32.xlu0 %v259, 4
        %v362 = vpop.permute.xlu0 %361
        %363 = vrot.lane.b32.xlu0 %v261, 4
        %v364 = vpop.permute.xlu0 %363
        %365 = vrot.lane.b32.xlu0 %v264, 4
        %v366 = vpop.permute.xlu0 %365
        %367 = vrot.lane.b32.xlu0 %v266, 4
        %v368 = vpop.permute.xlu0 %367
        %369 = vrot.lane.b32.xlu0 %v269, 4
        %v370 = vpop.permute.xlu0 %369
        %371 = vrot.lane.b32.xlu0 %v271, 4
        %v372 = vpop.permute.xlu0 %371
        %373 = vrot.lane.b32.xlu0 %v274, 4
        %v374 = vpop.permute.xlu0 %373
        %375 = vrot.lane.b32.xlu0 %v276, 4
        %v376 = vpop.permute.xlu0 %375
        %377 = vrot.lane.b32.xlu0 %v279, 4
        %v378 = vpop.permute.xlu0 %377
        %379 = vrot.lane.b32.xlu0 %v281, 4
        %v380 = vpop.permute.xlu0 %379
        %397 = vrot.lane.b32.xlu0 %v285, 8
        %v398 = vpop.permute.xlu0 %397
        %399 = vrot.lane.b32.xlu0 %v287, 8
        %v400 = vpop.permute.xlu0 %399
        %401 = vrot.lane.b32.xlu0 %v290, 8
        %v402 = vpop.permute.xlu0 %401
        %403 = vrot.lane.b32.xlu0 %v292, 8
        %v404 = vpop.permute.xlu0 %403
        %405 = vrot.lane.b32.xlu0 %v295, 8
        %v406 = vpop.permute.xlu0 %405
        %407 = vrot.lane.b32.xlu0 %v297, 8
        %v408 = vpop.permute.xlu0 %407
        %409 = vrot.lane.b32.xlu0 %v300, 8
        %v410 = vpop.permute.xlu0 %409
        %411 = vrot.lane.b32.xlu0 %v302, 8
        %v412 = vpop.permute.xlu0 %411
        %413 = vrot.lane.b32.xlu0 %v305, 8
        %v414 = vpop.permute.xlu0 %413
        %415 = vrot.lane.b32.xlu0 %v307, 8
        %v416 = vpop.permute.xlu0 %415
        %417 = vrot.lane.b32.xlu0 %v310, 8
        %v418 = vpop.permute.xlu0 %417
        %419 = vrot.lane.b32.xlu0 %v312, 8
        %v420 = vpop.permute.xlu0 %419
        %421 = vrot.lane.b32.xlu0 %v315, 8
        %v422 = vpop.permute.xlu0 %421
        %423 = vrot.lane.b32.xlu0 %v317, 8
        %v424 = vpop.permute.xlu0 %423
        %425 = vrot.lane.b32.xlu0 %v320, 8
        %v426 = vpop.permute.xlu0 %425
        %427 = vrot.lane.b32.xlu0 %v322, 8
        %v428 = vpop.permute.xlu0 %427
        %445 = vrot.lane.b32.xlu0 %v190, 12
        %v446 = vpop.permute.xlu0 %445
        %447 = vrot.lane.b32.xlu0 %v191, 12
        %v448 = vpop.permute.xlu0 %447
        %449 = vrot.lane.b32.xlu0 %v193, 12
        %v450 = vpop.permute.xlu0 %449
        %451 = vrot.lane.b32.xlu0 %v194, 12
        %v452 = vpop.permute.xlu0 %451
        %453 = vrot.lane.b32.xlu0 %v196, 12
        %v454 = vpop.permute.xlu0 %453
        %455 = vrot.lane.b32.xlu0 %v197, 12
        %v456 = vpop.permute.xlu0 %455
        %457 = vrot.lane.b32.xlu0 %v199, 12
        %v458 = vpop.permute.xlu0 %457
        %459 = vrot.lane.b32.xlu0 %v200, 12
        %v460 = vpop.permute.xlu0 %459
        %461 = vrot.lane.b32.xlu0 %v202, 12
        %v462 = vpop.permute.xlu0 %461
        %463 = vrot.lane.b32.xlu0 %v203, 12
        %v464 = vpop.permute.xlu0 %463
        %465 = vrot.lane.b32.xlu0 %v205, 12
        %v466 = vpop.permute.xlu0 %465
        %467 = vrot.lane.b32.xlu0 %v206, 12
        %v468 = vpop.permute.xlu0 %467
        %469 = vrot.lane.b32.xlu0 %v208, 12
        %v470 = vpop.permute.xlu0 %469
        %471 = vrot.lane.b32.xlu0 %v209, 12
        %v472 = vpop.permute.xlu0 %471
        %473 = vrot.lane.b32.xlu0 %v211, 12
        %v474 = vpop.permute.xlu0 %473
        %475 = vrot.lane.b32.xlu0 %v212, 12
        %v476 = vpop.permute.xlu0 %475
        %493 = vrot.lane.b32.xlu0 %v249, 16
        %v494 = vpop.permute.xlu0 %493
        %495 = vrot.lane.b32.xlu0 %v251, 16
        %v496 = vpop.permute.xlu0 %495
        %497 = vrot.lane.b32.xlu0 %v254, 16
        %v498 = vpop.permute.xlu0 %497
        %499 = vrot.lane.b32.xlu0 %v256, 16
        %v500 = vpop.permute.xlu0 %499
        %501 = vrot.lane.b32.xlu0 %v259, 16
        %v502 = vpop.permute.xlu0 %501
        %503 = vrot.lane.b32.xlu0 %v261, 16
        %v504 = vpop.permute.xlu0 %503
        %505 = vrot.lane.b32.xlu0 %v264, 16
        %v506 = vpop.permute.xlu0 %505
        %507 = vrot.lane.b32.xlu0 %v266, 16
        %v508 = vpop.permute.xlu0 %507
        %509 = vrot.lane.b32.xlu0 %v269, 16
        %v510 = vpop.permute.xlu0 %509
        %511 = vrot.lane.b32.xlu0 %v271, 16
        %v512 = vpop.permute.xlu0 %511
        %513 = vrot.lane.b32.xlu0 %v274, 16
        %v514 = vpop.permute.xlu0 %513
        %515 = vrot.lane.b32.xlu0 %v276, 16
        %v516 = vpop.permute.xlu0 %515
        %517 = vrot.lane.b32.xlu0 %v279, 16
        %v518 = vpop.permute.xlu0 %517
        %519 = vrot.lane.b32.xlu0 %v281, 16
        %v520 = vpop.permute.xlu0 %519
        %521 = vrot.lane.b32.xlu0 %v328, 16
        %v522 = vpop.permute.xlu0 %521
        %523 = vrot.lane.b32.xlu0 %v330, 16
        %v524 = vpop.permute.xlu0 %523
        %541 = vrot.lane.b32.xlu0 %v290, 20
        %v542 = vpop.permute.xlu0 %541
        %543 = vrot.lane.b32.xlu0 %v292, 20
        %v544 = vpop.permute.xlu0 %543
        %545 = vrot.lane.b32.xlu0 %v295, 20
        %v546 = vpop.permute.xlu0 %545
        %547 = vrot.lane.b32.xlu0 %v297, 20
        %v548 = vpop.permute.xlu0 %547
        %549 = vrot.lane.b32.xlu0 %v300, 20
        %v550 = vpop.permute.xlu0 %549
        %551 = vrot.lane.b32.xlu0 %v302, 20
        %v552 = vpop.permute.xlu0 %551
        %553 = vrot.lane.b32.xlu0 %v305, 20
        %v554 = vpop.permute.xlu0 %553
        %555 = vrot.lane.b32.xlu0 %v307, 20
        %v556 = vpop.permute.xlu0 %555
        %557 = vrot.lane.b32.xlu0 %v310, 20
        %v558 = vpop.permute.xlu0 %557
        %559 = vrot.lane.b32.xlu0 %v312, 20
        %v560 = vpop.permute.xlu0 %559
        %561 = vrot.lane.b32.xlu0 %v315, 20
        %v562 = vpop.permute.xlu0 %561
        %563 = vrot.lane.b32.xlu0 %v317, 20
        %v564 = vpop.permute.xlu0 %563
        %565 = vrot.lane.b32.xlu0 %v320, 20
        %v566 = vpop.permute.xlu0 %565
        %567 = vrot.lane.b32.xlu0 %v322, 20
        %v568 = vpop.permute.xlu0 %567
        %569 = vrot.lane.b32.xlu0 %v333, 20
        %v570 = vpop.permute.xlu0 %569
        %571 = vrot.lane.b32.xlu0 %v335, 20
        %v572 = vpop.permute.xlu0 %571
        %589 = vrot.lane.b32.xlu0 %v193, 24
        %v590 = vpop.permute.xlu0 %589
        %591 = vrot.lane.b32.xlu0 %v194, 24
        %v592 = vpop.permute.xlu0 %591
        %593 = vrot.lane.b32.xlu0 %v196, 24
        %v594 = vpop.permute.xlu0 %593
        %595 = vrot.lane.b32.xlu0 %v197, 24
        %v596 = vpop.permute.xlu0 %595
        %597 = vrot.lane.b32.xlu0 %v199, 24
        %v598 = vpop.permute.xlu0 %597
        %599 = vrot.lane.b32.xlu0 %v200, 24
        %v600 = vpop.permute.xlu0 %599
        %601 = vrot.lane.b32.xlu0 %v202, 24
        %v602 = vpop.permute.xlu0 %601
        %603 = vrot.lane.b32.xlu0 %v203, 24
        %v604 = vpop.permute.xlu0 %603
        %605 = vrot.lane.b32.xlu0 %v205, 24
        %v606 = vpop.permute.xlu0 %605
        %607 = vrot.lane.b32.xlu0 %v206, 24
        %v608 = vpop.permute.xlu0 %607
        %609 = vrot.lane.b32.xlu0 %v208, 24
        %v610 = vpop.permute.xlu0 %609
        %611 = vrot.lane.b32.xlu0 %v209, 24
        %v612 = vpop.permute.xlu0 %611
        %613 = vrot.lane.b32.xlu0 %v211, 24
        %v614 = vpop.permute.xlu0 %613
        %615 = vrot.lane.b32.xlu0 %v212, 24
        %v616 = vpop.permute.xlu0 %615
        %617 = vrot.lane.b32.xlu0 %v214, 24
        %v618 = vpop.permute.xlu0 %617
        %619 = vrot.lane.b32.xlu0 %v215, 24
        %v620 = vpop.permute.xlu0 %619
        %637 = vrot.lane.b32.xlu0 %v254, 28
        %v638 = vpop.permute.xlu0 %637
        %639 = vrot.lane.b32.xlu0 %v256, 28
        %v640 = vpop.permute.xlu0 %639
        %641 = vrot.lane.b32.xlu0 %v259, 28
        %v642 = vpop.permute.xlu0 %641
        %643 = vrot.lane.b32.xlu0 %v261, 28
        %v644 = vpop.permute.xlu0 %643
        %645 = vrot.lane.b32.xlu0 %v264, 28
        %v646 = vpop.permute.xlu0 %645
        %647 = vrot.lane.b32.xlu0 %v266, 28
        %v648 = vpop.permute.xlu0 %647
        %649 = vrot.lane.b32.xlu0 %v269, 28
        %v650 = vpop.permute.xlu0 %649
        %651 = vrot.lane.b32.xlu0 %v271, 28
        %v652 = vpop.permute.xlu0 %651
        %653 = vrot.lane.b32.xlu0 %v274, 28
        %v654 = vpop.permute.xlu0 %653
        %655 = vrot.lane.b32.xlu0 %v276, 28
        %v656 = vpop.permute.xlu0 %655
        %657 = vrot.lane.b32.xlu0 %v279, 28
        %v658 = vpop.permute.xlu0 %657
        %659 = vrot.lane.b32.xlu0 %v281, 28
        %v660 = vpop.permute.xlu0 %659
        %661 = vrot.lane.b32.xlu0 %v328, 28
        %v662 = vpop.permute.xlu0 %661
        %663 = vrot.lane.b32.xlu0 %v330, 28
        %v664 = vpop.permute.xlu0 %663
        %665 = vrot.lane.b32.xlu0 %v341, 28
        %v666 = vpop.permute.xlu0 %665
        %667 = vrot.lane.b32.xlu0 %v343, 28
        %v668 = vpop.permute.xlu0 %667
        %685 = vrot.lane.b32.xlu0 %v295, 32
        %v686 = vpop.permute.xlu0 %685
        %687 = vrot.lane.b32.xlu0 %v297, 32
        %v688 = vpop.permute.xlu0 %687
        %689 = vrot.lane.b32.xlu0 %v300, 32
        %v690 = vpop.permute.xlu0 %689
        %691 = vrot.lane.b32.xlu0 %v302, 32
        %v692 = vpop.permute.xlu0 %691
        %693 = vrot.lane.b32.xlu0 %v305, 32
        %v694 = vpop.permute.xlu0 %693
        %695 = vrot.lane.b32.xlu0 %v307, 32
        %v696 = vpop.permute.xlu0 %695
        %697 = vrot.lane.b32.xlu0 %v310, 32
        %v698 = vpop.permute.xlu0 %697
        %699 = vrot.lane.b32.xlu0 %v312, 32
        %v700 = vpop.permute.xlu0 %699
        %701 = vrot.lane.b32.xlu0 %v315, 32
        %v702 = vpop.permute.xlu0 %701
        %703 = vrot.lane.b32.xlu0 %v317, 32
        %v704 = vpop.permute.xlu0 %703
        %705 = vrot.lane.b32.xlu0 %v320, 32
        %v706 = vpop.permute.xlu0 %705
        %707 = vrot.lane.b32.xlu0 %v322, 32
        %v708 = vpop.permute.xlu0 %707
        %709 = vrot.lane.b32.xlu0 %v333, 32
        %v710 = vpop.permute.xlu0 %709
        %711 = vrot.lane.b32.xlu0 %v335, 32
        %v712 = vpop.permute.xlu0 %711
        %713 = vrot.lane.b32.xlu0 %v346, 32
        %v714 = vpop.permute.xlu0 %713
        %715 = vrot.lane.b32.xlu0 %v348, 32
        %v716 = vpop.permute.xlu0 %715
        %vm733 = vcmask 31744
        %v734 = vsel %vm733, %v187, %v350
        %v735 = vsel %vm733, %v188, %v352
        %v736 = vsel %vm733, %v190, %v354
        %v737 = vsel %vm733, %v191, %v356
        %v738 = vsel %vm733, %v193, %v358
        %v739 = vsel %vm733, %v194, %v360
        %v740 = vsel %vm733, %v196, %v362
        %v741 = vsel %vm733, %v197, %v364
        %v742 = vsel %vm733, %v199, %v366
        %v743 = vsel %vm733, %v200, %v368
        %v744 = vsel %vm733, %v202, %v370
        %v745 = vsel %vm733, %v203, %v372
        %v746 = vsel %vm733, %v205, %v374
        %v747 = vsel %vm733, %v206, %v376
        %v748 = vsel %vm733, %v208, %v378
        %v749 = vsel %vm733, %v209, %v380
        %vm750 = vcmask 64512
        %v751 = vsel %vm750, %v734, %v398
        %v752 = vsel %vm750, %v735, %v400
        %v753 = vsel %vm750, %v736, %v402
        %v754 = vsel %vm750, %v737, %v404
        %v755 = vsel %vm750, %v738, %v406
        %v756 = vsel %vm750, %v739, %v408
        %v757 = vsel %vm750, %v740, %v410
        %v758 = vsel %vm750, %v741, %v412
        %v759 = vsel %vm750, %v742, %v414
        %v760 = vsel %vm750, %v743, %v416
        %v761 = vsel %vm750, %v744, %v418
        %v762 = vsel %vm750, %v745, %v420
        %v763 = vsel %vm750, %v746, %v422
        %v764 = vsel %vm750, %v747, %v424
        %v765 = vsel %vm750, %v748, %v426
        %v766 = vsel %vm750, %v749, %v428
        %vm767 = vcmask 97280
        %v768 = vsel %vm767, %v751, %v446
        %v769 = vsel %vm767, %v752, %v448
        %v770 = vsel %vm767, %v753, %v450
        %v771 = vsel %vm767, %v754, %v452
        %v772 = vsel %vm767, %v755, %v454
        %v773 = vsel %vm767, %v756, %v456
        %v774 = vsel %vm767, %v757, %v458
        %v775 = vsel %vm767, %v758, %v460
        %v776 = vsel %vm767, %v759, %v462
        %v777 = vsel %vm767, %v760, %v464
        %v778 = vsel %vm767, %v761, %v466
        %v779 = vsel %vm767, %v762, %v468
        %v780 = vsel %vm767, %v763, %v470
        %v781 = vsel %vm767, %v764, %v472
        %v782 = vsel %vm767, %v765, %v474
        %v783 = vsel %vm767, %v766, %v476
        %vm784 = vcmask 130048
        %v785 = vsel %vm784, %v768, %v494
        %v786 = vsel %vm784, %v769, %v496
        %v787 = vsel %vm784, %v770, %v498
        %v788 = vsel %vm784, %v771, %v500
        %v789 = vsel %vm784, %v772, %v502
        %v790 = vsel %vm784, %v773, %v504
        %v791 = vsel %vm784, %v774, %v506
        %v792 = vsel %vm784, %v775, %v508
        %v793 = vsel %vm784, %v776, %v510
        %v794 = vsel %vm784, %v777, %v512
        %v795 = vsel %vm784, %v778, %v514
        %v796 = vsel %vm784, %v779, %v516
        %v797 = vsel %vm784, %v780, %v518
        %v798 = vsel %vm784, %v781, %v520
        %v799 = vsel %vm784, %v782, %v522
        %v800 = vsel %vm784, %v783, %v524
        %vm801 = vcmask 162816
        %v802 = vsel %vm801, %v785, %v542
        %v803 = vsel %vm801, %v786, %v544
        %v804 = vsel %vm801, %v787, %v546
        %v805 = vsel %vm801, %v788, %v548
        %v806 = vsel %vm801, %v789, %v550
        %v807 = vsel %vm801, %v790, %v552
        %v808 = vsel %vm801, %v791, %v554
        %v809 = vsel %vm801, %v792, %v556
        %v810 = vsel %vm801, %v793, %v558
        %v811 = vsel %vm801, %v794, %v560
        %v812 = vsel %vm801, %v795, %v562
        %v813 = vsel %vm801, %v796, %v564
        %v814 = vsel %vm801, %v797, %v566
        %v815 = vsel %vm801, %v798, %v568
        %v816 = vsel %vm801, %v799, %v570
        %v817 = vsel %vm801, %v800, %v572
        %vm818 = vcmask 195584
        %v819 = vsel %vm818, %v802, %v590
        %v820 = vsel %vm818, %v803, %v592
        %v821 = vsel %vm818, %v804, %v594
        %v822 = vsel %vm818, %v805, %v596
        %v823 = vsel %vm818, %v806, %v598
        %v824 = vsel %vm818, %v807, %v600
        %v825 = vsel %vm818, %v808, %v602
        %v826 = vsel %vm818, %v809, %v604
        %v827 = vsel %vm818, %v810, %v606
        %v828 = vsel %vm818, %v811, %v608
        %v829 = vsel %vm818, %v812, %v610
        %v830 = vsel %vm818, %v813, %v612
        %v831 = vsel %vm818, %v814, %v614
        %v832 = vsel %vm818, %v815, %v616
        %v833 = vsel %vm818, %v816, %v618
        %v834 = vsel %vm818, %v817, %v620
        %vm835 = vcmask 228352
        %v836 = vsel %vm835, %v819, %v638
        %v837 = vsel %vm835, %v820, %v640
        %v838 = vsel %vm835, %v821, %v642
        %v839 = vsel %vm835, %v822, %v644
        %v840 = vsel %vm835, %v823, %v646
        %v841 = vsel %vm835, %v824, %v648
        %v842 = vsel %vm835, %v825, %v650
        %v843 = vsel %vm835, %v826, %v652
        %v844 = vsel %vm835, %v827, %v654
        %v845 = vsel %vm835, %v828, %v656
        %v846 = vsel %vm835, %v829, %v658
        %v847 = vsel %vm835, %v830, %v660
        %v848 = vsel %vm835, %v831, %v662
        %v849 = vsel %vm835, %v832, %v664
        %v850 = vsel %vm835, %v833, %v666
        %v851 = vsel %vm835, %v834, %v668
        %vm852 = vcmask 261120
        %v853 = vsel %vm852, %v836, %v686
        %v854 = vsel %vm852, %v837, %v688
        %v855 = vsel %vm852, %v838, %v690
        %v856 = vsel %vm852, %v839, %v692
        %v857 = vsel %vm852, %v840, %v694
        %v858 = vsel %vm852, %v841, %v696
        %v859 = vsel %vm852, %v842, %v698
        %v860 = vsel %vm852, %v843, %v700
        %v861 = vsel %vm852, %v844, %v702
        %v862 = vsel %vm852, %v845, %v704
        %v863 = vsel %vm852, %v846, %v706
        %v864 = vsel %vm852, %v847, %v708
        %v865 = vsel %vm852, %v848, %v710
        %v866 = vsel %vm852, %v849, %v712
        %v867 = vsel %vm852, %v850, %v714
        %v868 = vsel %vm852, %v851, %v716
        %v869 = vld [vmem:[%s1] sm:$0xff]
        %v870 = vld [vmem:[%s1 + $0x8] sm:$0xff]
        %v871 = vld [vmem:[%s1 + $0x10] sm:$0xff]
        %v872 = vld [vmem:[%s1 + $0x18] sm:$0xff]
        %v873 = vld [vmem:[%s1 + $0x20] sm:$0xf]
        %v874 = vld [vmem:[%s2] sm:$0x1]
        %v876 = vperm.slane %v874, 0
        %vm878 = vcmask 293888
        %v880 = vsel %vm878, %v853, 0
        %v883 = vsel %vm878, %v854, 0
        %v886 = vsel %vm878, %v855, 0
        %v889 = vsel %vm878, %v856, 0
        %v892 = vsel %vm878, %v857, 0
        %v895 = vsel %vm878, %v858, 0
        %v898 = vsel %vm878, %v859, 0
        %v901 = vsel %vm878, %v860, 0
        %v904 = vsel %vm878, %v861, 0
        %v907 = vsel %vm878, %v862, 0
        %v910 = vsel %vm878, %v863, 0
        %v913 = vsel %vm878, %v864, 0
        %v916 = vsel %vm878, %v865, 0
        %v919 = vsel %vm878, %v866, 0
        %v922 = vsel %vm878, %v867, 0
        %v925 = vsel %vm878, %v868, 0
        %vm927 = vcmask 1043456
        %v929 = vsel %vm927, %v873, 0
        %931 = vmatpush.msra.mxu0 0.0
        %932 = vmatpush.msra.mxu0 0.0
        %933 = vmatpush.msra.mxu0 0.0
        %934 = vmatpush.msra.mxu0 0.0
        %935 = vmatpush.msra.mxu0 0.0
        %936 = vmatpush.msra.mxu0 0.0
        %937 = vmatpush.msra.mxu0 0.0
        %938 = vmatpush.msra.mxu0 0.0
        %939 = vmatpush.msra.mxu0 0.0
        %940 = vmatpush.msra.mxu0 0.0
        %941 = vmatpush.msra.mxu0 0.0
        %942 = vmatpush.msra.mxu0 %v929
        %943 = vmatpush.msra.mxu0 %v872
        %944 = vmatpush.msra.mxu0 %v871
        %945 = vmatpush.msra.mxu0 %v870
        %946 = vmatpush.msra.mxu0 %v869
        %947 = vmatmul.f32.gmra.mxu0 %v880
        %v948 = vpop.f32.mrf.mxu0
        %v949 = vadd.f32 %v876, %v948
        %950 = vmatmul.f32.gmra.mxu0 %v883
        %v951 = vpop.f32.mrf.mxu0
        %v952 = vadd.f32 %v876, %v951
        %953 = vmatmul.f32.gmra.mxu0 %v886
        %v954 = vpop.f32.mrf.mxu0
        %v955 = vadd.f32 %v876, %v954
        %956 = vmatmul.f32.gmra.mxu0 %v889
        %v957 = vpop.f32.mrf.mxu0
        %v958 = vadd.f32 %v876, %v957
        %959 = vmatmul.f32.gmra.mxu0 %v892
        %v960 = vpop.f32.mrf.mxu0
        %v961 = vadd.f32 %v876, %v960
        %962 = vmatmul.f32.gmra.mxu0 %v895
        %v963 = vpop.f32.mrf.mxu0
        %v964 = vadd.f32 %v876, %v963
        %965 = vmatmul.f32.gmra.mxu0 %v898
        %v966 = vpop.f32.mrf.mxu0
        %v967 = vadd.f32 %v876, %v966
        %968 = vmatmul.f32.gmra.mxu0 %v901
        %v969 = vpop.f32.mrf.mxu0
        %v970 = vadd.f32 %v876, %v969
        %971 = vmatmul.f32.gmra.mxu0 %v904
        %v972 = vpop.f32.mrf.mxu0
        %v973 = vadd.f32 %v876, %v972
        %974 = vmatmul.f32.gmra.mxu0 %v907
        %v975 = vpop.f32.mrf.mxu0
        %v976 = vadd.f32 %v876, %v975
        %977 = vmatmul.f32.gmra.mxu0 %v910
        %v978 = vpop.f32.mrf.mxu0
        %v979 = vadd.f32 %v876, %v978
        %980 = vmatmul.f32.gmra.mxu0 %v913
        %v981 = vpop.f32.mrf.mxu0
        %v982 = vadd.f32 %v876, %v981
        %983 = vmatmul.f32.gmra.mxu0 %v916
        %v984 = vpop.f32.mrf.mxu0
        %v985 = vadd.f32 %v876, %v984
        %986 = vmatmul.f32.gmra.mxu0 %v919
        %v987 = vpop.f32.mrf.mxu0
        %v988 = vadd.f32 %v876, %v987
        %989 = vmatmul.f32.gmra.mxu0 %v922
        %v990 = vpop.f32.mrf.mxu0
        %v991 = vadd.f32 %v876, %v990
        %992 = vmatmul.f32.gmra.mxu0 %v925
        %v993 = vpop.f32.mrf.mxu0
        %v994 = vadd.f32 %v876, %v993
        %995 = vdwg.mxu0
        %v996 = vmax.f32 %v949, 0.0
        %v997 = vmax.f32 %v952, 0.0
        %v998 = vmax.f32 %v955, 0.0
        %v999 = vmax.f32 %v958, 0.0
        %v1000 = vmax.f32 %v961, 0.0
        %v1001 = vmax.f32 %v964, 0.0
        %v1002 = vmax.f32 %v967, 0.0
        %v1003 = vmax.f32 %v970, 0.0
        %v1004 = vmax.f32 %v973, 0.0
        %v1005 = vmax.f32 %v976, 0.0
        %v1006 = vmax.f32 %v979, 0.0
        %v1007 = vmax.f32 %v982, 0.0
        %v1008 = vmax.f32 %v985, 0.0
        %v1009 = vmax.f32 %v988, 0.0
        %v1010 = vmax.f32 %v991, 0.0
        %v1011 = vmax.f32 %v994, 0.0
        %1012 = vst [vmem:[%s177] sm:$0xff] %v996
        %1013 = vst [vmem:[%s177 + $0x8] sm:$0xff] %v997
        %1014 = vst [vmem:[%s177 + $0x10] sm:$0xff] %v998
        %1015 = vst [vmem:[%s177 + $0x18] sm:$0xff] %v999
        %1016 = vst [vmem:[%s177 + $0x20] sm:$0xff] %v1000
        %1017 = vst [vmem:[%s177 + $0x28] sm:$0xff] %v1001
        %1018 = vst [vmem:[%s177 + $0x30] sm:$0xff] %v1002
        %1019 = vst [vmem:[%s177 + $0x38] sm:$0xff] %v1003
        %1020 = vst [vmem:[%s177 + $0x40] sm:$0xff] %v1004
        %1021 = vst [vmem:[%s177 + $0x48] sm:$0xff] %v1005
        %1022 = vst [vmem:[%s177 + $0x50] sm:$0xff] %v1006
        %1023 = vst [vmem:[%s177 + $0x58] sm:$0xff] %v1007
        %1024 = vst [vmem:[%s177 + $0x60] sm:$0xff] %v1008
        %1025 = vst [vmem:[%s177 + $0x68] sm:$0xff] %v1009
        %1026 = vst [vmem:[%s177 + $0x70] sm:$0xff] %v1010
        %1027 = vst [vmem:[%s177 + $0x78] sm:$0xff] %v1011
        %s1028 = sand.u32 %s107, 1
        %s1029 = scalar_lea.sflag [#allocation3], %s1028
        %s1030 = sand.u32 %s107, 1
        %s1031 = smul.addr %s1030, 128
        %s1032 = scalar_lea.vmem [#allocation2], %s1031
        // Predicated region
        $region33: #{tpu_custom_call.1} parent=31 // pred_check
          %p1033 = pneg %p117
        $region34: #{tpu_custom_call.1} parent=31 // pred_check_branch
          %1035 = sbr.rel (%p1033) target = $region36
        $region35: #{tpu_custom_call.1} parent=31 // pred_region
          %s1036 = smul.u32 8, %s22
          %1038 = vsyncadd %s1029, 0
          %s1039 = smul.addr %s1036, 2
          %s1040 = smul.addr %s21, 32
          %s1041 = sadd.s32 %s1039, %s1040
          %s1042 = smul.addr %s1041, 8
          %s1043 = scalar_lea.hbm %s3, %s1042
          %s1044 = sshll.u32 %s1032, 4
          %s1045 = int_to_ptr.vmem [resolvable:$true] %s1044
          %s1046 = sshll.u32 %s1043, 4
          %s1047 = int_to_ptr.hbm [resolvable:$true] %s1046
          %1052 = dma.vmem_to_hbm [thread:$0]  %s1045, 2048, %s1047, %s1029, 128, 128, 8
        $region36: #{tpu_custom_call.1} parent=31 // pred_fallthru
          _
      $region32: #{tpu_custom_call.1} parent=5 // pred_fallthru
        _
      %p1053 = scmp.le.s32.totalorder 2, %s12
      // Predicated region
      $region37: #{tpu_custom_call.1} parent=5 // pred_check
        %p1054 = pneg %p1053
      $region38: #{tpu_custom_call.1} parent=5 // pred_check_branch
        %1056 = sbr.rel (%p1054) target = $region40
      $region39: #{tpu_custom_call.1} parent=5 // pred_region
        %s1057 = ssub.s32 %s12, 2
        // Predicated region
        $region41: #{tpu_custom_call.1} parent=39 // pred_check
          %p1058 = pneg %p123
        $region42: #{tpu_custom_call.1} parent=39 // pred_check_branch
          %1060 = sbr.rel (%p1058) target = $region44
        $region43: #{tpu_custom_call.1} parent=39 // pred_region
          %s1061 = sand.u32 %s108, 1
          %s1062 = scalar_lea.sflag [#allocation3], %s1061
          %s1063 = sand.u32 %s108, 1
          %s1064 = smul.addr %s1063, 128
          %s1065 = scalar_lea.vmem [#allocation2], %s1064
          %1067 = dma.done %s1062, 2048
        $region44: #{tpu_custom_call.1} parent=39 // pred_fallthru
          _
      $region40: #{tpu_custom_call.1} parent=5 // pred_fallthru
        _
    $region6: #{tpu_custom_call.1} parent=1 // loop_footer
      %s16 = sadd.s32 1, %s12
    $region7: #{tpu_custom_call.1} parent=1 // loop_footer_branch
      %11 = sbr.rel target = $region3
    $region8: #{tpu_custom_call.1} parent=1 // loop_exit
      _
    %1068 = vsyncpa [#allocation3], 1
    %s1069 = scalar_lea.sflag [#allocation3], 1
    %1070 = vsyncpa %s1069, 1

</llo_original>
